<compile_context>
chip_gen: v7x
topology: tpu7x:2x2x1
jax: 0.10.0
libtpu: 0.0.40
codegen_flags: <defaults>
</compile_context>

<pallas_src>
import functools

import jax
import jax.numpy as jnp
from jax.experimental import pallas as pl
from jax.experimental.pallas import tpu as pltpu

LANES = 128
SUBLANES = 8


def _tpu_generation() -> int:
    """Best-effort TPU generation (5, 6, 7, ...); 0 if unknown."""
    try:
        kind = str(jax.devices()[0].device_kind)
    except Exception:
        return 0
    for ch in kind:
        if ch.isdigit():
            return int(ch)
    return 0


def _rmse_partial_kernel(yhat_ref, y_ref, o_ref, *, block_rows, bps, rows, needs_mask):
    s = pl.program_id(0)  # slice ("parallel"/megacore) axis
    k = pl.program_id(1)  # reduction axis within this slice

    @pl.when(k == 0)
    def _():
        o_ref[...] = jnp.zeros_like(o_ref)

    # Hot path: cast / sub / mul / fold -- pure VPU work, DMA-bound overall.
    d = yhat_ref[...].astype(jnp.float32) - y_ref[...].astype(jnp.float32)
    dsq = d * d

    def accumulate(vals):
        # (block_rows, 128) -> (block_rows//8, 8, 128) keeps the (8, 128) vreg
        # grouping intact; the axis-0 sum is a VALU tree add into one row-block.
        o_ref[...] += jnp.sum(vals.reshape(-1, SUBLANES, LANES), axis=0)

    if needs_mask:
        blk = s * bps + k            # unclamped logical block index
        row0 = blk * block_rows      # unclamped logical first row of this block

        @pl.when(row0 + block_rows <= rows)
        def _():
            # Common case: fully in-bounds block, no masking ops at all.
            accumulate(dsq)

        @pl.when(row0 + block_rows > rows)
        def _():
            # Ragged tail block, or a clamped duplicate block past the end:
            # zero out rows that are not real data.
            gid = row0 + jax.lax.broadcasted_iota(jnp.int32, (block_rows, LANES), 0)
            accumulate(jnp.where(gid < rows, dsq, jnp.float32(0.0)))
    else:
        accumulate(dsq)


def rmse_loss(yhat, y, *, chunk_rows=None, num_slices=None):
    """RMSE between yhat.flatten() and y (matches torch.sqrt(MSELoss(yhat.flatten(), y)))."""
    yhat = jnp.asarray(yhat)
    y = jnp.asarray(y)

    common = jnp.promote_types(yhat.dtype, y.dtype)
    if common not in (jnp.dtype(jnp.float32), jnp.dtype(jnp.bfloat16)):
        common = jnp.dtype(jnp.float32)
    yf = yhat.reshape(-1).astype(common)
    yt = y.reshape(-1).astype(common)
    assert yf.shape[0] == yt.shape[0], "yhat.flatten() and y must have equal length"
    n = yf.shape[0]

    gen = _tpu_generation()
    itemsize = jnp.dtype(common).itemsize

    # Sublane alignment: 8 rows for f32 tiles, 16 for bf16 tiles.
    row_align = SUBLANES * (4 // itemsize)
    align = row_align * LANES
    n_pad = pl.cdiv(n, align) * align
    if n_pad != n:
        # Small tail pad only (< row_align*128 elements); zeros contribute 0.
        yf = jnp.pad(yf, (0, n_pad - n))
        yt = jnp.pad(yt, (0, n_pad - n))
    rows = n_pad // LANES
    a = yf.reshape(rows, LANES)
    b = yt.reshape(rows, LANES)

    # Generation/dtype-aware tile size: constant DMA bytes per step
    # (~4 MiB/input on v7x, ~2 MiB on v5e/v6e). Double-buffered inputs then
    # use 16 MiB VMEM on v7x (32 MiB scoped default) and 8 MiB on v5e/v6e.
    if chunk_rows is None:
        block_bytes = (4 << 20) if gen >= 7 else (2 << 20)
        chunk_rows = block_bytes // (LANES * itemsize)
    chunk_rows = max(row_align, (chunk_rows // row_align) * row_align)
    block_rows = min(chunk_rows, rows)

    total_blocks = pl.cdiv(rows, block_rows)
    if num_slices is None:
        num_slices = 2 if gen >= 7 else 1  # v5e/v6e: single TensorCore
    n_slices = num_slices if total_blocks >= num_slices else 1
    bps = pl.cdiv(total_blocks, n_slices)  # blocks per slice
    needs_mask = (rows % block_rows != 0) or (n_slices * bps != total_blocks)
    last_block = total_blocks - 1

    def in_index(s, k):
        # Clamp indices past the end (those duplicate blocks are fully masked in-kernel).
        return (jnp.minimum(s * bps + k, last_block), 0)

    cost = pl.CostEstimate(
        flops=3 * n,
        transcendentals=0,
        bytes_accessed=2 * n * itemsize + n_slices * SUBLANES * LANES * 4,
    )

    # TODO(synk): on v7x, verify in a trace that the leading "parallel" axis is
    # sharded across both TensorCores; if not, switch it to pltpu.CORE_PARALLEL.
    partial = pl.pallas_call(
        functools.partial(
            _rmse_partial_kernel,
            block_rows=block_rows,
            bps=bps,
            rows=rows,
            needs_mask=needs_mask,
        ),
        out_shape=jax.ShapeDtypeStruct((n_slices * SUBLANES, LANES), jnp.float32),
        grid_spec=pltpu.PrefetchScalarGridSpec(
            num_scalar_prefetch=0,
            grid=(n_slices, bps),
            in_specs=[
                pl.BlockSpec((block_rows, LANES), in_index),
                pl.BlockSpec((block_rows, LANES), in_index),
            ],
            out_specs=pl.BlockSpec((SUBLANES, LANES), lambda s, k: (s, 0)),
        ),
        compiler_params=pltpu.CompilerParams(
            dimension_semantics=("parallel", "arbitrary"),
        ),
        cost_estimate=cost,
    )(a, b)

    # Tiny (n_slices*8, 128) cross-lane reduce + sqrt outside the hot loop.
    # TODO(synk): for the single-slice case this could be folded into the kernel
    # epilogue (SMEM scalar output) to drop the trailing XLA launch entirely.
    return jnp.sqrt(jnp.sum(partial) / jnp.float32(n))


if __name__ == "__main__":
    key = jax.random.PRNGKey(0)
    k1, k2, k3, k4, k5, k6 = jax.random.split(key, 6)

    # Test 1: NCHW predictions vs flat targets (f32, aligned, single block).
    yhat1 = jax.random.normal(k1, (2, 4, 16, 16), dtype=jnp.float32)
    y1 = jax.random.normal(k2, (2 * 4 * 16 * 16,), dtype=jnp.float32)
    out1 = rmse_loss(yhat1, y1)
    ref1 = jnp.sqrt(jnp.mean((yhat1.reshape(-1) - y1) ** 2))

    # Test 2: ragged length + forced small blocks + 2 slices -> exercises tail
    # pad, clamped duplicate-block masking and the multi-slice parallel split.
    yhat2 = jax.random.normal(k3, (2999,), dtype=jnp.float32)
    y2 = jax.random.normal(k4, (2999,), dtype=jnp.float32)
    out2 = rmse_loss(yhat2, y2, chunk_rows=8, num_slices=2)
    ref2 = jnp.sqrt(jnp.mean((yhat2 - y2) ** 2))

    # Test 2b: rows not a multiple of block_rows -> exercises the gated ragged
    # tail block (OOB rows zero-masked in-kernel).
    out2b = rmse_loss(yhat2, y2, chunk_rows=16, num_slices=1)

    # Test 3: bf16 inputs streamed as bf16 (cast to f32 inside the kernel).
    yhat3 = jax.random.normal(k5, (2, 3, 32, 32), dtype=jnp.bfloat16)
    y3 = jax.random.normal(k6, (2 * 3 * 32 * 32,), dtype=jnp.bfloat16)
    out3 = rmse_loss(yhat3, y3)
    ref3 = jnp.sqrt(
        jnp.mean((yhat3.reshape(-1).astype(jnp.float32) - y3.astype(jnp.float32)) ** 2)
    )

    jax.block_until_ready((out1, out2, out2b, out3))
    assert jnp.allclose(out1, ref1, rtol=1e-5, atol=1e-6), (out1, ref1)
    assert jnp.allclose(out2, ref2, rtol=1e-5, atol=1e-6), (out2, ref2)
    assert jnp.allclose(out2b, ref2, rtol=1e-5, atol=1e-6), (out2b, ref2)
    assert jnp.allclose(out3, ref3, rtol=1e-4, atol=1e-4), (out3, ref3)
    print("KERNEL_OK")
</pallas_src>

<mosaic_0001>
module attributes {stable_mosaic.version = 11 : i64} {
  func.func @_rmse_partial_kernel(%arg0: i32, %arg1: i32, %arg2: memref<16x128xf32, #tpu.memory_space<vmem>>, %arg3: memref<16x128xf32, #tpu.memory_space<vmem>>, %arg4: memref<8x128xf32, #tpu.memory_space<vmem>>) attributes {dimension_semantics = [#tpu.dimension_semantics<parallel>, #tpu.dimension_semantics<arbitrary>], iteration_bounds = array<i64: 1, 1>, scalar_prefetch = 0 : i64, scratch_operands = 0 : i64, tpu.core_type = #tpu.core_type<tc>, window_params = [{transform_indices = @transform_0, window_bounds = array<i64: 16, 128>}, {transform_indices = @transform_1, window_bounds = array<i64: 16, 128>}, {transform_indices = @transform_2, window_bounds = array<i64: 8, 128>}]} {
    %c0_i32 = arith.constant 0 : i32
    %0 = arith.cmpi eq, %arg1, %c0_i32 : i32
    %1 = arith.extui %0 : i1 to i32
    %c0_i32_0 = arith.constant 0 : i32
    %2 = arith.cmpi ne, %1, %c0_i32_0 : i32
    scf.if %2 {
      %cst_8 = arith.constant 0.000000e+00 : f32
      %12 = vector.broadcast %cst_8 : f32 to vector<8x128xf32>
      %c0_9 = arith.constant 0 : index
      %c0_10 = arith.constant 0 : index
      %13 = vector.load %arg4[%c0_9, %c0_10] : memref<8x128xf32, #tpu.memory_space<vmem>>, vector<8x128xf32>
      tpu.vector_store %arg4[%c0_9, %c0_10], %12 {strides = array<i32>} : memref<8x128xf32, #tpu.memory_space<vmem>>, vector<8x128xf32>,
    } else {
    }
    %c0 = arith.constant 0 : index
    %c0_1 = arith.constant 0 : index
    %3 = vector.load %arg2[%c0, %c0_1] : memref<16x128xf32, #tpu.memory_space<vmem>>, vector<16x128xf32>
    %c0_2 = arith.constant 0 : index
    %c0_3 = arith.constant 0 : index
    %4 = vector.load %arg3[%c0_2, %c0_3] : memref<16x128xf32, #tpu.memory_space<vmem>>, vector<16x128xf32>
    %5 = arith.subf %3, %4 : vector<16x128xf32>
    %6 = arith.mulf %5, %5 : vector<16x128xf32>
    %c0_4 = arith.constant 0 : index
    %c0_5 = arith.constant 0 : index
    %7 = vector.load %arg4[%c0_4, %c0_5] : memref<8x128xf32, #tpu.memory_space<vmem>>, vector<8x128xf32>
    %8 = vector.shape_cast %6 : vector<16x128xf32> to vector<2x8x128xf32>
    %cst = arith.constant dense<0.000000e+00> : vector<8x128xf32>
    %9 = vector.multi_reduction <add>, %8, %cst [0] : vector<2x8x128xf32> to vector<8x128xf32>
    %10 = arith.addf %7, %9 : vector<8x128xf32>
    %c0_6 = arith.constant 0 : index
    %c0_7 = arith.constant 0 : index
    %11 = vector.load %arg4[%c0_6, %c0_7] : memref<8x128xf32, #tpu.memory_space<vmem>>, vector<8x128xf32>
    tpu.vector_store %arg4[%c0_6, %c0_7], %10 {strides = array<i32>} : memref<8x128xf32, #tpu.memory_space<vmem>>, vector<8x128xf32>,
    return
  }
  func.func @transform_0(%arg0: i32, %arg1: i32) -> (i32, i32) {
    %c1_i32 = arith.constant 1 : i32
    %0 = arith.muli %arg0, %c1_i32 : i32
    %1 = arith.addi %0, %arg1 : i32
    %c0_i32 = arith.constant 0 : i32
    %2 = arith.minsi %1, %c0_i32 : i32
    %c0_i32_0 = arith.constant 0 : i32
    %c0_i32_1 = arith.constant 0 : i32
    return %2, %c0_i32_0 : i32, i32
  }
  func.func @transform_1(%arg0: i32, %arg1: i32) -> (i32, i32) {
    %c1_i32 = arith.constant 1 : i32
    %0 = arith.muli %arg0, %c1_i32 : i32
    %1 = arith.addi %0, %arg1 : i32
    %c0_i32 = arith.constant 0 : i32
    %2 = arith.minsi %1, %c0_i32 : i32
    %c0_i32_0 = arith.constant 0 : i32
    %c0_i32_1 = arith.constant 0 : i32
    return %2, %c0_i32_0 : i32, i32
  }
  func.func @transform_2(%arg0: i32, %arg1: i32) -> (i32, i32) {
    %c0_i32 = arith.constant 0 : i32
    %c0_i32_0 = arith.constant 0 : i32
    return %arg0, %c0_i32 : i32, i32
  }
}

</mosaic_0001>

<llo_original>
// kernel: tpu_custom_call.1
$region0: #{tpu_custom_call.1}
  #allocation0 [shape = 'u32[]', space=smem, size = 0x4, offset = 0x4, fixed_abs, tag = 'smem constant byte address 0x4 - core index']
  #allocation1 [shape = 'u32[144,128]{1,0:T(1,128)}', space=vmem, size = 0x12000, scoped, tag = 'internal scratch']
  %s0 = inlined_call_operand.hbm [shape: f32[16,128], index: 0, kind: input, shape index: {}]
  %s1 = inlined_call_operand.hbm [shape: f32[16,128], index: 1, kind: input, shape index: {}]
  %s2 = inlined_call_operand.hbm [shape: f32[8,128], index: 2, kind: output, shape index: {}]
  %s3 = sld [smem:[#allocation0]]
  $region30: #{tpu_custom_call.1} parent=0
    _
  %s5 = ssub.s32 1, %s3
  %s6 = scalar_select 0, %s5, %s3
  $region1: #{tpu_custom_call.1} parent=0
    #allocation2 [shape = 'u8[8192]{0}', space=vmem, size = 0x2000, scoped, tag = 'input window, operand 0, single buffered']
    #allocation3 [shape = 's32[1]{0}', space=sflag, size = 0x4, scoped, tag = 'scoped memory for tpu_custom_call.1']
    #allocation4 [shape = 's32[1]{0}', space=sflag, size = 0x4, scoped, tag = 'scoped memory for tpu_custom_call.1']
    #allocation5 [shape = 'u8[8192]{0}', space=vmem, size = 0x2000, scoped, tag = 'input window, operand 1, single buffered']
    #allocation6 [shape = 's32[1]{0}', space=sflag, size = 0x4, scoped, tag = 'scoped memory for tpu_custom_call.1']
    #allocation7 [shape = 'u8[4096]{0}', space=vmem, size = 0x1000, scoped, tag = 'output window, operand 0, single buffered']
    %7 = vsyncpa [#allocation3], 0
    %8 = vsyncpa [#allocation6], 0
    %9 = vsyncpa [#allocation4], 0
    // Predicated region
    $region2: #{tpu_custom_call.1} parent=1 // pred_check
      _
    $region3: #{tpu_custom_call.1} parent=1 // pred_check_branch
      %11 = sbr.rel (0) target = $region5
    $region4: #{tpu_custom_call.1} parent=1 // pred_region
      %s12 = sadd.s32 0, 0
      %p13 = scmp.lt.s32.totalorder %s12, 0
      %s14 = scalar_select %p13, %s12, 0
      %s15 = smul.u32 2, %s14
      %s17 = ssub.s32 256, 256
      %18 = vsyncadd [#allocation3], %s17
      %s19 = smul.addr %s15, 128
      %s20 = scalar_lea.hbm %s0, %s19
      %s21 = sshll.u32 [#allocation2], 4
      %s22 = int_to_ptr.vmem [resolvable:$true] %s21
      %27 = dma.hbm_to_vmem [thread:$0]  %s20, 256, %s22, [#allocation3], 128, 128, 8
    $region5: #{tpu_custom_call.1} parent=1 // pred_fallthru
      _
    // Predicated region
    $region6: #{tpu_custom_call.1} parent=1 // pred_check
      _
    $region7: #{tpu_custom_call.1} parent=1 // pred_check_branch
      %29 = sbr.rel (0) target = $region9
    $region8: #{tpu_custom_call.1} parent=1 // pred_region
      %s30 = sadd.s32 0, 0
      %p31 = scmp.lt.s32.totalorder %s30, 0
      %s32 = scalar_select %p31, %s30, 0
      %s33 = smul.u32 2, %s32
      %s35 = ssub.s32 256, 256
      %36 = vsyncadd [#allocation6], %s35
      %s37 = smul.addr %s33, 128
      %s38 = scalar_lea.hbm %s1, %s37
      %s39 = sshll.u32 [#allocation5], 4
      %s40 = int_to_ptr.vmem [resolvable:$true] %s39
      %45 = dma.hbm_to_vmem [thread:$0]  %s38, 256, %s40, [#allocation6], 128, 128, 8
    $region9: #{tpu_custom_call.1} parent=1 // pred_fallthru
      _
    // Predicated region
    $region10: #{tpu_custom_call.1} parent=1 // pred_check
      _
    $region11: #{tpu_custom_call.1} parent=1 // pred_check_branch
      %47 = sbr.rel (0) target = $region13
    $region12: #{tpu_custom_call.1} parent=1 // pred_region
      %48 = dma.done [#allocation3], 256
    $region13: #{tpu_custom_call.1} parent=1 // pred_fallthru
      _
    // Predicated region
    $region14: #{tpu_custom_call.1} parent=1 // pred_check
      _
    $region15: #{tpu_custom_call.1} parent=1 // pred_check_branch
      %50 = sbr.rel (0) target = $region17
    $region16: #{tpu_custom_call.1} parent=1 // pred_region
      %51 = dma.done [#allocation6], 256
    $region17: #{tpu_custom_call.1} parent=1 // pred_fallthru
      _
    %s52 = sadd.s32 0, 0
    %p53 = scmp.lt.s32.totalorder %s52, 0
    %s54 = scalar_select %p53, %s52, 0
    %s55 = smul.u32 2, %s54
    %s56 = sadd.s32 0, 0
    %p57 = scmp.lt.s32.totalorder %s56, 0
    %s58 = scalar_select %p57, %s56, 0
    %s59 = smul.u32 2, %s58
    %p60 = scmp.eq.s32.totalorder 0, 0
    // Predicated region
    $region18: #{tpu_custom_call.1} parent=1 // pred_check
      %p61 = pneg %p60
    $region19: #{tpu_custom_call.1} parent=1 // pred_check_branch
      %63 = sbr.rel (%p61) target = $region21
    $region20: #{tpu_custom_call.1} parent=1 // pred_region
      %64 = vst [vmem:[#allocation7] sm:$0xff] 0.0
    $region21: #{tpu_custom_call.1} parent=1 // pred_fallthru
      _
    %v65 = vld [vmem:[#allocation2] sm:$0xff]
    %v66 = vld [vmem:[#allocation2 + $0x8] sm:$0xff]
    %v67 = vld [vmem:[#allocation5] sm:$0xff]
    %v68 = vld [vmem:[#allocation5 + $0x8] sm:$0xff]
    %v69 = vsub.f32 %v65, %v67
    %v70 = vsub.f32 %v66, %v68
    %v71 = vmul.f32 %v69, %v69
    %v72 = vmul.f32 %v70, %v70
    %v73 = vld [vmem:[#allocation7] sm:$0xff]
    %v74 = vadd.f32 %v71, %v72
    %v75 = vadd.f32 %v73, %v74
    %76 = vst [vmem:[#allocation7] sm:$0xff] %v75
    // Predicated region
    $region22: #{tpu_custom_call.1} parent=1 // pred_check
      _
    $region23: #{tpu_custom_call.1} parent=1 // pred_check_branch
      %78 = sbr.rel (0) target = $region25
    $region24: #{tpu_custom_call.1} parent=1 // pred_region
      %s80 = ssub.s32 128, 128
      %81 = vsyncadd [#allocation4], %s80
      %s83 = sshll.u32 [#allocation7], 4
      %s84 = int_to_ptr.vmem [resolvable:$true] %s83
      %86 = dma.vmem_to_hbm [thread:$0]  %s84, 128, %s2, [#allocation4]
    $region25: #{tpu_custom_call.1} parent=1 // pred_fallthru
      _
    // Predicated region
    $region26: #{tpu_custom_call.1} parent=1 // pred_check
      _
    $region27: #{tpu_custom_call.1} parent=1 // pred_check_branch
      %88 = sbr.rel (0) target = $region29
    $region28: #{tpu_custom_call.1} parent=1 // pred_region
      %89 = dma.done [#allocation4], 128
    $region29: #{tpu_custom_call.1} parent=1 // pred_fallthru
      _
    %90 = vsyncpa [#allocation3], 1
    %91 = vsyncpa [#allocation6], 1
    %92 = vsyncpa [#allocation4], 1

</llo_original>
